<compile_context>
chip_gen: v6e
topology: v6e:2x2x1
jax: 0.10.0
libtpu: 0.0.40
codegen_flags: <defaults>
</compile_context>

<pallas_src>
import functools

import jax
import jax.numpy as jnp
from jax.experimental import pallas as pl
from jax.experimental.pallas import tpu as pltpu

# ----------------------------- config (small) --------------------------------
D = 32            # n_embd
INNER = 4 * D     # n_inner (config.n_inner is None -> 4 * n_embd)
INIT_RANGE = 0.02

_WEIGHT_BYTES = D * INNER * 2 * 2 + (INNER + D) * 4   # two bf16 weights + f32 biases


# --------------------------- chip-generation helpers ---------------------------
def _tpu_generation():
    try:
        kind = jax.devices()[0].device_kind.lower()
    except Exception:
        return "unknown"
    if "v5 lite" in kind or "v5lite" in kind or "v5e" in kind:
        return "v5e"
    if "v6" in kind or "trillium" in kind:
        return "v6e"
    if "v7" in kind:
        return "v7x"
    return "unknown"


def _elementwise_dtype(gen):
    # bf16 bias-add + GELU only where the VPU/EUP natively support bf16.
    return jnp.bfloat16 if gen in ("v6e", "v7x") else jnp.float32


def _vmem_caps(gen):
    # Conservative scoped-VMEM ceiling per generation (leave headroom below physical).
    if gen in ("v7x", "unknown"):
        return 48 << 20          # 64 MiB physical on v7x
    return 96 << 20              # 128 MiB physical on v5e / v6e


def _step_bytes(rb, x_bytes):
    # double-buffered x / out blocks + live h (bf16 + f32 copies) + resident weights
    return 2 * rb * D * x_bytes + 2 * rb * D * 4 + rb * INNER * 6 + _WEIGHT_BYTES


def _pick_row_block(rows, x_bytes, vmem_cap):
    """Largest legal row block: full rows if it fits, else a multiple of 8 dividing rows."""
    budget = vmem_cap - (4 << 20)                      # slack for compiler scratch
    if _step_bytes(rows, x_bytes) <= budget:
        return rows                                    # single grid step
    # rows is large: find the biggest rb (multiple of 8, divides rows) within budget.
    cap_rows = 8192
    rb = min(rows - (rows % 8), cap_rows)
    rb -= rb % 8
    while rb >= 8:
        if rows % rb == 0 and _step_bytes(rb, x_bytes) <= budget:
            return rb
        rb -= 8
    # Fall back to the full array (always a legal BlockSpec); compiler may spill.
    return rows


# ----------------------------- Pallas kernel ----------------------------------
def _gelu_tanh(x):
    # GPT-2 style "gelu_new" (tanh approximation) — ACTIVATIONS[config.activation_function].
    return 0.5 * x * (1.0 + jnp.tanh(0.7978845608028654 * (x + 0.044715 * x * x * x)))


def mlp_kernel(x_ref, fcw_ref, fcb_ref, pw_ref, pb_ref, o_ref, *, ew_dtype):
    x = x_ref[...]
    if x.dtype != jnp.bfloat16:                       # accept bf16 input without recast
        x = x.astype(jnp.bfloat16)
    # fc: (rows, D) @ (D, INNER) -- bf16 operands, f32 accumulate on the MXU.
    h = jnp.dot(x, fcw_ref[...], preferred_element_type=jnp.float32)
    # bias add + GELU in bf16 on v6e/v7x (bf16 VALU/EUP), f32 on v5e.
    h = h.astype(ew_dtype) + fcb_ref[...].astype(ew_dtype)
    h = _gelu_tanh(h)
    h = h.astype(jnp.bfloat16)                        # no-op in the bf16 path
    # proj: (rows, INNER) @ (INNER, D) -- f32 accumulate, f32 bias.
    y = jnp.dot(h, pw_ref[...], preferred_element_type=jnp.float32) + pb_ref[...]
    # dropout (eval mode) -> identity.
    # TODO(synk): training-mode dropout (resid_pdrop) not implemented.
    o_ref[...] = y.astype(o_ref.dtype)


# ----------------------------- wrapper -----------------------------------------
def transformer_mlp_forward(params, hidden_states):
    """hidden_states: (B, T, D) f32 or bf16  ->  (B, T, D) f32."""
    B, T, d_in = hidden_states.shape
    assert d_in == D, f"expected last dim {D}, got {d_in}"
    rows = B * T
    x2d = hidden_states.reshape(rows, D)
    x_bytes = jnp.dtype(hidden_states.dtype).itemsize

    gen = _tpu_generation()
    ew_dtype = _elementwise_dtype(gen)
    vmem_cap = _vmem_caps(gen)

    rb = _pick_row_block(rows, x_bytes, vmem_cap)
    assert rb == rows or (rb % 8 == 0 and rows % rb == 0)
    num_blocks = rows // rb

    vmem_limit = int(min(vmem_cap, max(32 << 20, 2 * _step_bytes(rb, x_bytes))))

    cost = pl.CostEstimate(
        flops=4 * rows * D * INNER,                  # two matmuls
        transcendentals=rows * INNER,                # one tanh per hidden element
        bytes_accessed=rows * D * (x_bytes + 4) + _WEIGHT_BYTES,
    )

    out2d = pl.pallas_call(
        functools.partial(mlp_kernel, ew_dtype=ew_dtype),
        out_shape=jax.ShapeDtypeStruct((rows, D), jnp.float32),
        grid=(num_blocks,),
        in_specs=[
            pl.BlockSpec((rb, D), lambda i: (i, 0)),        # activations: row slab
            pl.BlockSpec((D, INNER), lambda i: (0, 0)),     # fc weight (resident)
            pl.BlockSpec((1, INNER), lambda i: (0, 0)),     # fc bias
            pl.BlockSpec((INNER, D), lambda i: (0, 0)),     # proj weight (resident)
            pl.BlockSpec((1, D), lambda i: (0, 0)),         # proj bias
        ],
        out_specs=pl.BlockSpec((rb, D), lambda i: (i, 0)),
        compiler_params=pltpu.CompilerParams(
            dimension_semantics=("parallel",),              # shards rows across v7x TCs
            vmem_limit_bytes=vmem_limit,
        ),
        cost_estimate=cost,
    )(x2d, params["fcw"], params["fcb"], params["pw"], params["pb"])
    return out2d.reshape(B, T, D)


# ----------------------------- deterministic params ----------------------------
def init_params(key):
    k_fc, k_pj, k_fb, k_pb = jax.random.split(key, 4)
    # PyTorch Linear weights are (out, in); the kernel uses the x @ W.T convention,
    # so store the transposed weights (in bf16 for the MXU) and f32 biases.
    w_fc = INIT_RANGE * jax.random.normal(k_fc, (INNER, D), jnp.float32)   # fc.weight
    w_pj = INIT_RANGE * jax.random.normal(k_pj, (D, INNER), jnp.float32)   # proj.weight
    b_fc = INIT_RANGE * jax.random.normal(k_fb, (INNER,), jnp.float32)     # fc.bias
    b_pj = INIT_RANGE * jax.random.normal(k_pb, (D,), jnp.float32)         # proj.bias
    return {
        "fcw": w_fc.T.astype(jnp.bfloat16),          # (D, INNER)
        "fcb": b_fc.reshape(1, INNER),               # (1, INNER) f32
        "pw": w_pj.T.astype(jnp.bfloat16),           # (INNER, D)
        "pb": b_pj.reshape(1, D),                    # (1, D) f32
    }


def _reference(params, hidden_states, ew_dtype):
    """Pure-JAX reference mirroring the kernel's (generation-aware) numerics."""
    x = hidden_states.reshape(-1, D).astype(jnp.bfloat16)
    h = jnp.dot(x, params["fcw"], preferred_element_type=jnp.float32)
    h = h.astype(ew_dtype) + params["fcb"].astype(ew_dtype)
    h = _gelu_tanh(h).astype(jnp.bfloat16)
    y = jnp.dot(h, params["pw"], preferred_element_type=jnp.float32) + params["pb"]
    return y.reshape(hidden_states.shape).astype(jnp.float32)


# ----------------------------------- main ---------------------------------------
if __name__ == "__main__":
    B, T = 2, 8
    key = jax.random.PRNGKey(0)
    pkey, xkey = jax.random.split(key)
    params = init_params(pkey)

    hidden_states = jax.random.normal(xkey, (B, T, D), jnp.float32)

    out = transformer_mlp_forward(params, hidden_states)
    out = jax.block_until_ready(out)

    assert out.shape == (B, T, D) and out.dtype == jnp.float32
    assert bool(jnp.all(jnp.isfinite(out)))

    ref = _reference(params, hidden_states, _elementwise_dtype(_tpu_generation()))
    assert bool(jnp.allclose(out, ref, atol=1e-2, rtol=1e-1))

    print("KERNEL_OK")
</pallas_src>

<mosaic_0001>
module attributes {stable_mosaic.version = 11 : i64} {
  func.func @mlp_kernel(%arg0: i32, %arg1: memref<16x32xf32, #tpu.memory_space<vmem>>, %arg2: memref<32x128xbf16, #tpu.memory_space<vmem>>, %arg3: memref<1x128xf32, #tpu.memory_space<vmem>>, %arg4: memref<128x32xbf16, #tpu.memory_space<vmem>>, %arg5: memref<1x32xf32, #tpu.memory_space<vmem>>, %arg6: memref<16x32xf32, #tpu.memory_space<vmem>>) attributes {dimension_semantics = [#tpu.dimension_semantics<parallel>], iteration_bounds = array<i64: 1>, scalar_prefetch = 0 : i64, scratch_operands = 0 : i64, tpu.core_type = #tpu.core_type<tc>, window_params = [{transform_indices = @transform_0, window_bounds = array<i64: 16, 32>}, {pipeline_mode = #tpu.pipeline_mode<synchronous>, transform_indices = @transform_1, window_bounds = array<i64: 32, 128>}, {pipeline_mode = #tpu.pipeline_mode<synchronous>, transform_indices = @transform_2, window_bounds = array<i64: 1, 128>}, {pipeline_mode = #tpu.pipeline_mode<synchronous>, transform_indices = @transform_3, window_bounds = array<i64: 128, 32>}, {pipeline_mode = #tpu.pipeline_mode<synchronous>, transform_indices = @transform_4, window_bounds = array<i64: 1, 32>}, {transform_indices = @transform_5, window_bounds = array<i64: 16, 32>}]} {
    %c0 = arith.constant 0 : index
    %c0_0 = arith.constant 0 : index
    %0 = vector.load %arg1[%c0, %c0_0] : memref<16x32xf32, #tpu.memory_space<vmem>>, vector<16x32xf32>
    %1 = arith.truncf %0 : vector<16x32xf32> to vector<16x32xbf16>
    %c0_1 = arith.constant 0 : index
    %c0_2 = arith.constant 0 : index
    %2 = vector.load %arg2[%c0_1, %c0_2] : memref<32x128xbf16, #tpu.memory_space<vmem>>, vector<32x128xbf16>
    %cst = arith.constant dense<0.000000e+00> : vector<16x128xf32>
    %3 = tpu.matmul %1, %2, %cst {dimension_numbers = #tpu.dot_dimension_numbers<[1], [0], [0], [1], [0, 0, 1, 1], [], []>} : vector<16x32xbf16>, vector<32x128xbf16>, vector<16x128xf32> -> vector<16x128xf32>
    %c0_3 = arith.constant 0 : index
    %c0_4 = arith.constant 0 : index
    %4 = vector.load %arg3[%c0_3, %c0_4] : memref<1x128xf32, #tpu.memory_space<vmem>>, vector<1x128xf32>
    %5 = vector.broadcast %4 : vector<1x128xf32> to vector<16x128xf32>
    %6 = arith.addf %3, %5 : vector<16x128xf32>
    %cst_5 = arith.constant 5.000000e-01 : f32
    %7 = vector.broadcast %cst_5 : f32 to vector<16x128xf32>
    %8 = arith.mulf %7, %6 : vector<16x128xf32>
    %cst_6 = arith.constant 4.471500e-02 : f32
    %9 = vector.broadcast %cst_6 : f32 to vector<16x128xf32>
    %10 = arith.mulf %9, %6 : vector<16x128xf32>
    %11 = arith.mulf %10, %6 : vector<16x128xf32>
    %12 = arith.mulf %11, %6 : vector<16x128xf32>
    %13 = arith.addf %6, %12 : vector<16x128xf32>
    %cst_7 = arith.constant 0.797884583 : f32
    %14 = vector.broadcast %cst_7 : f32 to vector<16x128xf32>
    %15 = arith.mulf %14, %13 : vector<16x128xf32>
    %16 = math.tanh %15 : vector<16x128xf32>
    %cst_8 = arith.constant 1.000000e+00 : f32
    %17 = vector.broadcast %cst_8 : f32 to vector<16x128xf32>
    %18 = arith.addf %17, %16 : vector<16x128xf32>
    %19 = arith.mulf %8, %18 : vector<16x128xf32>
    %20 = arith.truncf %19 : vector<16x128xf32> to vector<16x128xbf16>
    %c0_9 = arith.constant 0 : index
    %c0_10 = arith.constant 0 : index
    %21 = vector.load %arg4[%c0_9, %c0_10] : memref<128x32xbf16, #tpu.memory_space<vmem>>, vector<128x32xbf16>
    %cst_11 = arith.constant dense<0.000000e+00> : vector<16x32xf32>
    %22 = tpu.matmul %20, %21, %cst_11 {dimension_numbers = #tpu.dot_dimension_numbers<[1], [0], [0], [1], [0, 0, 1, 1], [], []>} : vector<16x128xbf16>, vector<128x32xbf16>, vector<16x32xf32> -> vector<16x32xf32>
    %c0_12 = arith.constant 0 : index
    %c0_13 = arith.constant 0 : index
    %23 = vector.load %arg5[%c0_12, %c0_13] : memref<1x32xf32, #tpu.memory_space<vmem>>, vector<1x32xf32>
    %24 = vector.broadcast %23 : vector<1x32xf32> to vector<16x32xf32>
    %25 = arith.addf %22, %24 : vector<16x32xf32>
    %c0_14 = arith.constant 0 : index
    %c0_15 = arith.constant 0 : index
    %26 = vector.load %arg6[%c0_14, %c0_15] : memref<16x32xf32, #tpu.memory_space<vmem>>, vector<16x32xf32>
    tpu.vector_store %arg6[%c0_14, %c0_15], %25 {strides = array<i32>} : memref<16x32xf32, #tpu.memory_space<vmem>>, vector<16x32xf32>,
    return
  }
  func.func @transform_0(%arg0: i32) -> (i32, i32) {
    %c0_i32 = arith.constant 0 : i32
    %c0_i32_0 = arith.constant 0 : i32
    return %arg0, %c0_i32 : i32, i32
  }
  func.func @transform_1(%arg0: i32) -> (i32, i32) {
    %c0_i32 = arith.constant 0 : i32
    %c0_i32_0 = arith.constant 0 : i32
    %c0_i32_1 = arith.constant 0 : i32
    return %c0_i32, %c0_i32_0 : i32, i32
  }
  func.func @transform_2(%arg0: i32) -> (i32, i32) {
    %c0_i32 = arith.constant 0 : i32
    %c0_i32_0 = arith.constant 0 : i32
    %c0_i32_1 = arith.constant 0 : i32
    return %c0_i32, %c0_i32_0 : i32, i32
  }
  func.func @transform_3(%arg0: i32) -> (i32, i32) {
    %c0_i32 = arith.constant 0 : i32
    %c0_i32_0 = arith.constant 0 : i32
    %c0_i32_1 = arith.constant 0 : i32
    return %c0_i32, %c0_i32_0 : i32, i32
  }
  func.func @transform_4(%arg0: i32) -> (i32, i32) {
    %c0_i32 = arith.constant 0 : i32
    %c0_i32_0 = arith.constant 0 : i32
    %c0_i32_1 = arith.constant 0 : i32
    return %c0_i32, %c0_i32_0 : i32, i32
  }
  func.func @transform_5(%arg0: i32) -> (i32, i32) {
    %c0_i32 = arith.constant 0 : i32
    %c0_i32_0 = arith.constant 0 : i32
    return %arg0, %c0_i32 : i32, i32
  }
}

</mosaic_0001>

<llo_original>
// kernel: tpu_custom_call.1
$region0: #{tpu_custom_call.1}
  #allocation0 [shape = 'u32[]', space=smem, size = 0x4, offset = 0x4, fixed_abs, tag = 'smem constant byte address 0x4 - core index']
  #allocation1 [shape = 'u32[144,128]{1,0:T(1,128)}', space=vmem, size = 0x12000, scoped, tag = 'internal scratch']
  %s0 = inlined_call_operand.vmem [shape: f32[16,32], index: 0, kind: input, shape index: {}]
  %s1 = inlined_call_operand.vmem [shape: bf16[32,128], index: 1, kind: input, shape index: {}]
  %s2 = inlined_call_operand.vmem [shape: f32[1,128], index: 2, kind: input, shape index: {}]
  %s3 = inlined_call_operand.vmem [shape: bf16[128,32], index: 3, kind: input, shape index: {}]
  %s4 = inlined_call_operand.vmem [shape: f32[1,32], index: 4, kind: input, shape index: {}]
  %s5 = inlined_call_operand.hbm [shape: f32[16,32], index: 5, kind: output, shape index: {}]
  %s6 = sld [smem:[#allocation0]]
  $region30: #{tpu_custom_call.1} parent=0
    _
  %s8 = ssub.s32 1, %s6
  %s9 = scalar_select 0, %s8, %s6
  $region1: #{tpu_custom_call.1} parent=0
    #allocation2 [shape = 'u8[8192]{0}', space=vmem, size = 0x2000, scoped, tag = 'output window, operand 0, single buffered']
    #allocation3 [shape = 's32[1]{0}', space=sflag, size = 0x4, scoped, tag = 'scoped memory for tpu_custom_call.1']
    %10 = vsyncpa [#allocation3], 0
    // Predicated region
    $region2: #{tpu_custom_call.1} parent=1 // pred_check
      _
    $region3: #{tpu_custom_call.1} parent=1 // pred_check_branch
      %12 = sbr.rel (0) target = $region5
    $region4: #{tpu_custom_call.1} parent=1 // pred_region
      _
    $region5: #{tpu_custom_call.1} parent=1 // pred_fallthru
      _
    // Predicated region
    $region6: #{tpu_custom_call.1} parent=1 // pred_check
      _
    $region7: #{tpu_custom_call.1} parent=1 // pred_check_branch
      %14 = sbr.rel (0) target = $region9
    $region8: #{tpu_custom_call.1} parent=1 // pred_region
      _
    $region9: #{tpu_custom_call.1} parent=1 // pred_fallthru
      _
    // Predicated region
    $region10: #{tpu_custom_call.1} parent=1 // pred_check
      _
    $region11: #{tpu_custom_call.1} parent=1 // pred_check_branch
      %16 = sbr.rel (0) target = $region13
    $region12: #{tpu_custom_call.1} parent=1 // pred_region
      _
    $region13: #{tpu_custom_call.1} parent=1 // pred_fallthru
      _
    // Predicated region
    $region14: #{tpu_custom_call.1} parent=1 // pred_check
      _
    $region15: #{tpu_custom_call.1} parent=1 // pred_check_branch
      %18 = sbr.rel (0) target = $region17
    $region16: #{tpu_custom_call.1} parent=1 // pred_region
      _
    $region17: #{tpu_custom_call.1} parent=1 // pred_fallthru
      _
    // Predicated region
    $region18: #{tpu_custom_call.1} parent=1 // pred_check
      _
    $region19: #{tpu_custom_call.1} parent=1 // pred_check_branch
      %20 = sbr.rel (0) target = $region21
    $region20: #{tpu_custom_call.1} parent=1 // pred_region
      _
    $region21: #{tpu_custom_call.1} parent=1 // pred_fallthru
      _
    %v22 = vld [vmem:[%s0] sm:$0xff]
    %v23 = vld [vmem:[%s0 + $0x8] sm:$0xff]
    %v24 = vpack.c.bf16 %v23, %v22
    %v25 = vld [vmem:[%s1] sm:$0xf]
    %v26 = vld [vmem:[%s1 + $0x4] sm:$0xf]
    %v27 = vld [vmem:[%s1 + $0x8] sm:$0xf]
    %v28 = vld [vmem:[%s1 + $0xc] sm:$0xf]
    %v29 = vld [vmem:[%s2] sm:$0x1]
    %v31 = vlaneseq
    %v32 = vshrl.u32 %v31, 7
    %v33 = vsub.s32 0, %v32
    %v34 = vrot.slane %v29, %v33
    %v40 = vunpack.c.l.b16 %v25
    %v41 = vunpack.c.l.b16 %v26
    %v42 = vunpack.c.l.b16 %v27
    %v43 = vunpack.c.l.b16 %v28
    %v44 = vpack.c.b16 %v41, %v40
    %v45 = vpack.c.b16 %v43, %v42
    %vm48 = vcmask 261120
    %v50 = vsel %vm48, %v24, 0
    %52 = vmatprep.subr.bf16.mxu0 0
    %53 = vmatpush1.bf16.msra.mxu0 0
    %54 = vmatprep.subr.bf16.mxu0 0
    %55 = vmatpush1.bf16.msra.mxu0 0
    %56 = vmatprep.subr.bf16.mxu0 0
    %57 = vmatpush1.bf16.msra.mxu0 0
    %58 = vmatprep.subr.bf16.mxu0 0
    %59 = vmatpush1.bf16.msra.mxu0 0
    %60 = vmatprep.subr.bf16.mxu0 0
    %61 = vmatpush1.bf16.msra.mxu0 0
    %62 = vmatprep.subr.bf16.mxu0 0
    %63 = vmatpush1.bf16.msra.mxu0 0
    %64 = vmatprep.subr.bf16.mxu0 0
    %65 = vmatpush1.bf16.msra.mxu0 %v45
    %66 = vmatprep.subr.bf16.mxu0 0
    %67 = vmatpush1.bf16.msra.mxu0 %v44
    %68 = vmatprep.subr.bf16.mxu0 0
    %69 = vmatpush2.bf16.msra.mxu0 0
    %70 = vmatprep.subr.bf16.mxu0 0
    %71 = vmatpush2.bf16.msra.mxu0 0
    %72 = vmatprep.subr.bf16.mxu0 0
    %73 = vmatpush2.bf16.msra.mxu0 0
    %74 = vmatprep.subr.bf16.mxu0 0
    %75 = vmatpush2.bf16.msra.mxu0 0
    %76 = vmatprep.subr.bf16.mxu0 0
    %77 = vmatpush2.bf16.msra.mxu0 0
    %78 = vmatprep.subr.bf16.mxu0 0
    %79 = vmatpush2.bf16.msra.mxu0 0
    %80 = vmatprep.subr.bf16.mxu0 0
    %81 = vmatpush2.bf16.msra.mxu0 0
    %82 = vmatprep.subr.bf16.mxu0 0
    %83 = vmatpush2.bf16.msra.mxu0 0
    %84 = vmatprep.mubr.bf16.mxu0 0
    %85 = vmatmul.mubr.bf16.gmra.mxu0 %v50
    %v86 = vpop.f32.mrf.mxu0
    %v87 = vadd.f32 %v34, %v86
    %v88 = vpop.f32.mrf.mxu0
    %v89 = vpop.f32.mrf.mxu0
    %v90 = vadd.f32 %v34, %v89
    %v91 = vpop.f32.mrf.mxu0
    %92 = vdwg.mxu0
    %v93 = vmul.f32 %v87, 0.5
    %v94 = vmul.f32 %v90, 0.5
    %v95 = vmul.f32 %v87, 0.044715
    %v96 = vmul.f32 %v90, 0.044715
    %v97 = vmul.f32 %v95, %v87
    %v98 = vmul.f32 %v96, %v90
    %v99 = vmul.f32 %v97, %v87
    %v100 = vmul.f32 %v98, %v90
    %v101 = vadd.f32 %v87, %v99
    %v102 = vadd.f32 %v90, %v100
    %v103 = vmul.f32 %v101, 0.7978846
    %v104 = vmul.f32 %v102, 0.7978846
    %v105 = vtanh.pop %v103
    %v106 = vtanh.pop %v104
    %v107 = vadd.f32 %v105, 1.0
    %v108 = vadd.f32 %v106, 1.0
    %v109 = vmul.f32 %v93, %v107
    %v110 = vmul.f32 %v94, %v108
    %v111 = vpack.c.bf16 %v110, %v109
    %v112 = vld [vmem:[%s3] sm:$0xf]
    %v113 = vld [vmem:[%s3 + $0x4] sm:$0xf]
    %v114 = vld [vmem:[%s3 + $0x8] sm:$0xf]
    %v115 = vld [vmem:[%s3 + $0xc] sm:$0xf]
    %v116 = vld [vmem:[%s3 + $0x10] sm:$0xf]
    %v117 = vld [vmem:[%s3 + $0x14] sm:$0xf]
    %v118 = vld [vmem:[%s3 + $0x18] sm:$0xf]
    %v119 = vld [vmem:[%s3 + $0x1c] sm:$0xf]
    %v120 = vld [vmem:[%s3 + $0x20] sm:$0xf]
    %v121 = vld [vmem:[%s3 + $0x24] sm:$0xf]
    %v122 = vld [vmem:[%s3 + $0x28] sm:$0xf]
    %v123 = vld [vmem:[%s3 + $0x2c] sm:$0xf]
    %v124 = vld [vmem:[%s3 + $0x30] sm:$0xf]
    %v125 = vld [vmem:[%s3 + $0x34] sm:$0xf]
    %v126 = vld [vmem:[%s3 + $0x38] sm:$0xf]
    %v127 = vld [vmem:[%s3 + $0x3c] sm:$0xf]
    %v128 = vld [vmem:[%s4] sm:$0x1]
    %v130 = vlaneseq
    %v131 = vshrl.u32 %v130, 7
    %v132 = vsub.s32 0, %v131
    %v133 = vrot.slane %v128, %v132
    %v151 = vunpack.c.l.b16 %v112
    %v152 = vunpack.c.l.b16 %v113
    %v153 = vunpack.c.l.b16 %v114
    %v154 = vunpack.c.l.b16 %v115
    %v155 = vunpack.c.l.b16 %v116
    %v156 = vunpack.c.l.b16 %v117
    %v157 = vunpack.c.l.b16 %v118
    %v158 = vunpack.c.l.b16 %v119
    %v159 = vunpack.c.l.b16 %v120
    %v160 = vunpack.c.l.b16 %v121
    %v161 = vunpack.c.l.b16 %v122
    %v162 = vunpack.c.l.b16 %v123
    %v163 = vunpack.c.l.b16 %v124
    %v164 = vunpack.c.l.b16 %v125
    %v165 = vunpack.c.l.b16 %v126
    %v166 = vunpack.c.l.b16 %v127
    %v167 = vpack.c.b16 %v152, %v151
    %v168 = vpack.c.b16 %v154, %v153
    %v169 = vpack.c.b16 %v156, %v155
    %v170 = vpack.c.b16 %v158, %v157
    %v171 = vpack.c.b16 %v160, %v159
    %v172 = vpack.c.b16 %v162, %v161
    %v173 = vpack.c.b16 %v164, %v163
    %v174 = vpack.c.b16 %v166, %v165
    %183 = vmatprep.subr.bf16.mxu0 0
    %184 = vmatpush1.bf16.msra.mxu0 %v174
    %185 = vmatprep.subr.bf16.mxu0 0
    %186 = vmatpush1.bf16.msra.mxu0 %v173
    %187 = vmatprep.subr.bf16.mxu0 0
    %188 = vmatpush1.bf16.msra.mxu0 %v172
    %189 = vmatprep.subr.bf16.mxu0 0
    %190 = vmatpush1.bf16.msra.mxu0 %v171
    %191 = vmatprep.subr.bf16.mxu0 0
    %192 = vmatpush1.bf16.msra.mxu0 %v170
    %193 = vmatprep.subr.bf16.mxu0 0
    %194 = vmatpush1.bf16.msra.mxu0 %v169
    %195 = vmatprep.subr.bf16.mxu0 0
    %196 = vmatpush1.bf16.msra.mxu0 %v168
    %197 = vmatprep.subr.bf16.mxu0 0
    %198 = vmatpush1.bf16.msra.mxu0 %v167
    %199 = vmatprep.subr.bf16.mxu0 0
    %200 = vmatpush2.bf16.msra.mxu0 0
    %201 = vmatprep.subr.bf16.mxu0 0
    %202 = vmatpush2.bf16.msra.mxu0 0
    %203 = vmatprep.subr.bf16.mxu0 0
    %204 = vmatpush2.bf16.msra.mxu0 0
    %205 = vmatprep.subr.bf16.mxu0 0
    %206 = vmatpush2.bf16.msra.mxu0 0
    %207 = vmatprep.subr.bf16.mxu0 0
    %208 = vmatpush2.bf16.msra.mxu0 0
    %209 = vmatprep.subr.bf16.mxu0 0
    %210 = vmatpush2.bf16.msra.mxu0 0
    %211 = vmatprep.subr.bf16.mxu0 0
    %212 = vmatpush2.bf16.msra.mxu0 0
    %213 = vmatprep.subr.bf16.mxu0 0
    %214 = vmatpush2.bf16.msra.mxu0 0
    %215 = vmatprep.mubr.bf16.mxu0 0
    %216 = vmatmul.mubr.bf16.gmra.mxu0 %v111
    %v217 = vpop.f32.mrf.mxu0
    %v218 = vadd.f32 %v133, %v217
    %v219 = vpop.f32.mrf.mxu0
    %v220 = vpop.f32.mrf.mxu0
    %v221 = vadd.f32 %v133, %v220
    %v222 = vpop.f32.mrf.mxu0
    %223 = vdwg.mxu0
    %224 = vst.msk [vmem:[#allocation2] sm:$0xff] %vm48, %v218
    %225 = vst.msk [vmem:[#allocation2 + $0x8] sm:$0xff] %vm48, %v221
    // Predicated region
    $region22: #{tpu_custom_call.1} parent=1 // pred_check
      _
    $region23: #{tpu_custom_call.1} parent=1 // pred_check_branch
      %227 = sbr.rel (0) target = $region25
    $region24: #{tpu_custom_call.1} parent=1 // pred_region
      %s229 = ssub.s32 256, 256
      %230 = vsyncadd [#allocation3], %s229
      %s231 = sshll.u32 [#allocation2], 4
      %s232 = int_to_ptr.vmem [resolvable:$true] %s231
      %237 = dma.vmem_to_hbm [thread:$0]  %s232, 256, %s5, [#allocation3], 128, 128, 8
    $region25: #{tpu_custom_call.1} parent=1 // pred_fallthru
      _
    // Predicated region
    $region26: #{tpu_custom_call.1} parent=1 // pred_check
      _
    $region27: #{tpu_custom_call.1} parent=1 // pred_check_branch
      %239 = sbr.rel (0) target = $region29
    $region28: #{tpu_custom_call.1} parent=1 // pred_region
      %240 = dma.done [#allocation3], 256
    $region29: #{tpu_custom_call.1} parent=1 // pred_fallthru
      _
    %241 = vsyncpa [#allocation3], 1

</llo_original>
